<compile_context>
chip_gen: v6e
topology: v6e:2x2x1
jax: 0.10.0
libtpu: 0.0.40
codegen_flags: <defaults>
</compile_context>

<pallas_src>
import functools

import jax
import jax.numpy as jnp
from jax.experimental import pallas as pl
from jax.experimental.pallas import tpu as pltpu

LANE = 128  # TPU lane width: pad node/feature/hidden/class dims to multiples of this


def _round_up(v: int, m: int) -> int:
    return (v + m - 1) // m * m


def _pad2(arr, rows: int, cols: int):
    r, c = arr.shape
    return jnp.pad(arr, ((0, rows - r), (0, cols - c)))


# ---------------------------------------------------------------------------
# Fused kernel: both conv layers + ReLU + masked log_softmax in one shot.
# ---------------------------------------------------------------------------
def _p1gcn_fused_kernel(x_ref, a_ref, w1_ref, b1_ref, w2_ref, b2_ref, out_ref,
                        *, h_p, c_p, num_classes):
    x = x_ref[...]                       # [N, F]   bf16
    a = a_ref[...]                       # [N, N]   bf16 (row-normalized if "mean")

    # ---- layer 1: one MXU pass over the concatenated [F, 2H] weight --------------
    xw1 = jnp.dot(x, w1_ref[...], preferred_element_type=jnp.float32)   # [N, 2H] f32
    self1 = xw1[:, :h_p]                                  # X @ W1_self   (f32)
    p1 = xw1[:, h_p:].astype(jnp.bfloat16)                # X @ W1_nbr    (bf16)
    agg1 = jnp.dot(a, p1, preferred_element_type=jnp.float32)           # A @ P1
    h = jnp.maximum(self1 + agg1 + b1_ref[...], 0.0)      # ReLU; dropout = identity
    hb = h.astype(jnp.bfloat16)

    # ---- layer 2: one MXU pass over the concatenated [H, 2C] weight --------------
    hw2 = jnp.dot(hb, w2_ref[...], preferred_element_type=jnp.float32)  # [N, 2C] f32
    self2 = hw2[:, :c_p]                                  # H @ W2_self
    p2 = hw2[:, c_p:].astype(jnp.bfloat16)                # H @ W2_nbr
    agg2 = jnp.dot(a, p2, preferred_element_type=jnp.float32)           # A @ P2
    logits = self2 + agg2 + b2_ref[...]

    # ---- fused log_softmax over the real (unpadded) class lanes -------------------
    lane = jax.lax.broadcasted_iota(jnp.int32, logits.shape, 1)
    valid = lane < num_classes
    masked = jnp.where(valid, logits, jnp.float32(-1e30))
    m = jnp.max(masked, axis=-1, keepdims=True)
    lse = jnp.log(jnp.sum(jnp.exp(masked - m), axis=-1, keepdims=True))
    out_ref[...] = jnp.where(valid, masked - m - lse, 0.0)


# ---------------------------------------------------------------------------
# Host-side glue
# ---------------------------------------------------------------------------
def build_adjacency(edge_index, num_nodes, reduction_type="mean"):
    """Dense in-adjacency A[dst, src] (edge multiplicity kept); "mean" normalizes rows
    by in-degree.  Hoisted out of the forward: build ONCE per graph and reuse."""
    src, dst = edge_index[0], edge_index[1]
    a = jnp.zeros((num_nodes, num_nodes), jnp.float32).at[dst, src].add(1.0)
    if reduction_type == "mean":
        deg = jnp.sum(a, axis=1, keepdims=True)
        a = a / jnp.maximum(deg, 1.0)
    return a


def p1gcn_forward(x, a_norm, w1c, w1b, b1, w2c, w2b, b2):
    """x: [N, F] f32; a_norm: [N, N] prebuilt adjacency; weights in (in, out) layout:
    w1c/w1b: [F, H] (self / neighbor halves of Linear(2F, H)), w2c/w2b: [H, C];
    biases [1, H] / [1, C].  Returns [N, C] log-probabilities (f32)."""
    n, f = x.shape
    h_dim = w1c.shape[1]
    c_dim = w2c.shape[1]

    n_p = _round_up(n, LANE)   # N also appears as A's lane dim -> pad to 128
    f_p = _round_up(f, LANE)
    h_p = _round_up(h_dim, LANE)
    c_p = _round_up(c_dim, LANE)

    # Zero-pad to lane-dense shapes; bf16 MXU operands, f32 accumulation.
    x_b = _pad2(x, n_p, f_p).astype(jnp.bfloat16)
    a_b = _pad2(a_norm, n_p, n_p).astype(jnp.bfloat16)
    # Concatenated self||neighbor halves: one 2*h_p (>=256)-wide RHS per layer.
    w1_b = jnp.concatenate(
        [_pad2(w1c, f_p, h_p), _pad2(w1b, f_p, h_p)], axis=1).astype(jnp.bfloat16)
    w2_b = jnp.concatenate(
        [_pad2(w2c, h_p, c_p), _pad2(w2b, h_p, c_p)], axis=1).astype(jnp.bfloat16)
    b1_p = _pad2(b1, 1, h_p)   # f32
    b2_p = _pad2(b2, 1, c_p)   # f32

    full = lambda i: (0, 0)    # single-step grid: every block is the full array
    kernel = functools.partial(
        _p1gcn_fused_kernel, h_p=h_p, c_p=c_p, num_classes=c_dim)

    out = pl.pallas_call(
        kernel,
        grid=(1,),
        in_specs=[pl.BlockSpec((n_p, f_p), full),       # X
                  pl.BlockSpec((n_p, n_p), full),       # A
                  pl.BlockSpec((f_p, 2 * h_p), full),   # [W1_self || W1_nbr]
                  pl.BlockSpec((1, h_p), full),         # b1
                  pl.BlockSpec((h_p, 2 * c_p), full),   # [W2_self || W2_nbr]
                  pl.BlockSpec((1, c_p), full)],        # b2
        out_specs=pl.BlockSpec((n_p, c_p), full),
        out_shape=jax.ShapeDtypeStruct((n_p, c_p), jnp.float32),
        compiler_params=pltpu.CompilerParams(
            dimension_semantics=("arbitrary",),
            vmem_limit_bytes=48 * 1024 * 1024,
        ),
    )(x_b, a_b, w1_b, b1_p, w2_b, b2_p)

    return out[:n, :c_dim]


def _reference(x, a_norm, w1c, w1b, b1, w2c, w2b, b2):
    """Pure-JAX reference mirroring the kernel's bf16 operand quantization points."""
    bf, f32 = jnp.bfloat16, jnp.float32
    xb, ab = x.astype(bf), a_norm.astype(bf)
    p1 = jnp.dot(xb, w1b.astype(bf), preferred_element_type=f32).astype(bf)
    h = jnp.maximum(jnp.dot(xb, w1c.astype(bf), preferred_element_type=f32)
                    + jnp.dot(ab, p1, preferred_element_type=f32) + b1, 0.0)
    hb = h.astype(bf)
    p2 = jnp.dot(hb, w2b.astype(bf), preferred_element_type=f32).astype(bf)
    logits = (jnp.dot(hb, w2c.astype(bf), preferred_element_type=f32)
              + jnp.dot(ab, p2, preferred_element_type=f32) + b2)
    return jax.nn.log_softmax(logits, axis=-1)


if __name__ == "__main__":
    # Small, deterministic synthetic stand-in for Cornell/WebKB (N=183, F=1703, C=5).
    N_NODES = 30
    NUM_FEATURES = 64
    HIDDEN = 32
    NUM_CLASSES = 5
    N_EDGES = 120
    REDUCTION = "mean"   # reduction_type of ConvolutionalLayer_1P

    key = jax.random.PRNGKey(0)
    kx, ke, kw1, kb1, kw2, kb2 = jax.random.split(key, 6)

    # Node features + NormalizeFeatures() transform (row-normalize to sum 1).
    x_raw = jax.random.uniform(kx, (N_NODES, NUM_FEATURES), dtype=jnp.float32)
    row_sum = jnp.sum(x_raw, axis=-1, keepdims=True)
    x = x_raw / jnp.where(row_sum == 0, 1.0, row_sum)

    # Random directed edge list [2, E].
    edge_index = jax.random.randint(ke, (2, N_EDGES), 0, N_NODES, dtype=jnp.int32)

    # ConvolutionalLayer_1P uses Linear(2*in, out): init full weight, split into halves.
    def lin_init(kw, kb, fan_in, fan_out):
        bound = 1.0 / jnp.sqrt(jnp.float32(fan_in))
        w = jax.random.uniform(kw, (fan_in, fan_out), jnp.float32, -bound, bound)
        b = jax.random.uniform(kb, (1, fan_out), jnp.float32, -bound, bound)
        return w, b

    w1, b1 = lin_init(kw1, kb1, 2 * NUM_FEATURES, HIDDEN)
    w2, b2 = lin_init(kw2, kb2, 2 * HIDDEN, NUM_CLASSES)
    w1c, w1b = w1[:NUM_FEATURES], w1[NUM_FEATURES:]   # self / neighbor halves
    w2c, w2b = w2[:HIDDEN], w2[HIDDEN:]

    # Adjacency built ONCE per graph (hoisted out of the forward pass).
    a_norm = build_adjacency(edge_index, N_NODES, REDUCTION)

    fwd = jax.jit(p1gcn_forward)
    out = fwd(x, a_norm, w1c, w1b, b1, w2c, w2b, b2)
    out = jax.block_until_ready(out)

    ref = _reference(x, a_norm, w1c, w1b, b1, w2c, w2b, b2)
    assert out.shape == (N_NODES, NUM_CLASSES)
    assert bool(jnp.all(jnp.isfinite(out)))
    assert jnp.allclose(out, ref, atol=2e-2, rtol=2e-2), "mismatch vs JAX reference"

    print("KERNEL_OK")
</pallas_src>

<mosaic_0001>
module attributes {stable_mosaic.version = 11 : i64} {
  func.func @_p1gcn_fused_kernel(%arg0: i32, %arg1: memref<128x128xbf16, #tpu.memory_space<vmem>>, %arg2: memref<128x128xbf16, #tpu.memory_space<vmem>>, %arg3: memref<128x256xbf16, #tpu.memory_space<vmem>>, %arg4: memref<1x128xf32, #tpu.memory_space<vmem>>, %arg5: memref<128x256xbf16, #tpu.memory_space<vmem>>, %arg6: memref<1x128xf32, #tpu.memory_space<vmem>>, %arg7: memref<128x128xf32, #tpu.memory_space<vmem>>) attributes {dimension_semantics = [#tpu.dimension_semantics<arbitrary>], iteration_bounds = array<i64: 1>, scalar_prefetch = 0 : i64, scratch_operands = 0 : i64, tpu.core_type = #tpu.core_type<tc>, window_params = [{pipeline_mode = #tpu.pipeline_mode<synchronous>, transform_indices = @transform_0, window_bounds = array<i64: 128, 128>}, {pipeline_mode = #tpu.pipeline_mode<synchronous>, transform_indices = @transform_1, window_bounds = array<i64: 128, 128>}, {pipeline_mode = #tpu.pipeline_mode<synchronous>, transform_indices = @transform_2, window_bounds = array<i64: 128, 256>}, {pipeline_mode = #tpu.pipeline_mode<synchronous>, transform_indices = @transform_3, window_bounds = array<i64: 1, 128>}, {pipeline_mode = #tpu.pipeline_mode<synchronous>, transform_indices = @transform_4, window_bounds = array<i64: 128, 256>}, {pipeline_mode = #tpu.pipeline_mode<synchronous>, transform_indices = @transform_5, window_bounds = array<i64: 1, 128>}, {pipeline_mode = #tpu.pipeline_mode<synchronous>, transform_indices = @transform_6, window_bounds = array<i64: 128, 128>}]} {
    %c0 = arith.constant 0 : index
    %c0_0 = arith.constant 0 : index
    %0 = vector.load %arg1[%c0, %c0_0] : memref<128x128xbf16, #tpu.memory_space<vmem>>, vector<128x128xbf16>
    %c0_1 = arith.constant 0 : index
    %c0_2 = arith.constant 0 : index
    %1 = vector.load %arg2[%c0_1, %c0_2] : memref<128x128xbf16, #tpu.memory_space<vmem>>, vector<128x128xbf16>
    %c0_3 = arith.constant 0 : index
    %c0_4 = arith.constant 0 : index
    %2 = vector.load %arg3[%c0_3, %c0_4] : memref<128x256xbf16, #tpu.memory_space<vmem>>, vector<128x256xbf16>
    %cst = arith.constant dense<0.000000e+00> : vector<128x256xf32>
    %3 = tpu.matmul %0, %2, %cst {dimension_numbers = #tpu.dot_dimension_numbers<[1], [0], [0], [1], [0, 0, 1, 1], [], []>} : vector<128x128xbf16>, vector<128x256xbf16>, vector<128x256xf32> -> vector<128x256xf32>
    %4 = vector.extract_strided_slice %3 {offsets = [0, 0], sizes = [128, 128], strides = [1, 1]} : vector<128x256xf32> to vector<128x128xf32>
    %5 = vector.extract_strided_slice %3 {offsets = [0, 128], sizes = [128, 128], strides = [1, 1]} : vector<128x256xf32> to vector<128x128xf32>
    %6 = arith.truncf %5 : vector<128x128xf32> to vector<128x128xbf16>
    %cst_5 = arith.constant dense<0.000000e+00> : vector<128x128xf32>
    %7 = tpu.matmul %1, %6, %cst_5 {dimension_numbers = #tpu.dot_dimension_numbers<[1], [0], [0], [1], [0, 0, 1, 1], [], []>} : vector<128x128xbf16>, vector<128x128xbf16>, vector<128x128xf32> -> vector<128x128xf32>
    %8 = arith.addf %4, %7 : vector<128x128xf32>
    %c0_6 = arith.constant 0 : index
    %c0_7 = arith.constant 0 : index
    %9 = vector.load %arg4[%c0_6, %c0_7] : memref<1x128xf32, #tpu.memory_space<vmem>>, vector<1x128xf32>
    %10 = vector.broadcast %9 : vector<1x128xf32> to vector<128x128xf32>
    %11 = arith.addf %8, %10 : vector<128x128xf32>
    %cst_8 = arith.constant 0.000000e+00 : f32
    %12 = vector.broadcast %cst_8 : f32 to vector<128x128xf32>
    %13 = arith.maximumf %11, %12 : vector<128x128xf32>
    %14 = arith.truncf %13 : vector<128x128xf32> to vector<128x128xbf16>
    %c0_9 = arith.constant 0 : index
    %c0_10 = arith.constant 0 : index
    %15 = vector.load %arg5[%c0_9, %c0_10] : memref<128x256xbf16, #tpu.memory_space<vmem>>, vector<128x256xbf16>
    %cst_11 = arith.constant dense<0.000000e+00> : vector<128x256xf32>
    %16 = tpu.matmul %14, %15, %cst_11 {dimension_numbers = #tpu.dot_dimension_numbers<[1], [0], [0], [1], [0, 0, 1, 1], [], []>} : vector<128x128xbf16>, vector<128x256xbf16>, vector<128x256xf32> -> vector<128x256xf32>
    %17 = vector.extract_strided_slice %16 {offsets = [0, 0], sizes = [128, 128], strides = [1, 1]} : vector<128x256xf32> to vector<128x128xf32>
    %18 = vector.extract_strided_slice %16 {offsets = [0, 128], sizes = [128, 128], strides = [1, 1]} : vector<128x256xf32> to vector<128x128xf32>
    %19 = arith.truncf %18 : vector<128x128xf32> to vector<128x128xbf16>
    %cst_12 = arith.constant dense<0.000000e+00> : vector<128x128xf32>
    %20 = tpu.matmul %1, %19, %cst_12 {dimension_numbers = #tpu.dot_dimension_numbers<[1], [0], [0], [1], [0, 0, 1, 1], [], []>} : vector<128x128xbf16>, vector<128x128xbf16>, vector<128x128xf32> -> vector<128x128xf32>
    %21 = arith.addf %17, %20 : vector<128x128xf32>
    %c0_13 = arith.constant 0 : index
    %c0_14 = arith.constant 0 : index
    %22 = vector.load %arg6[%c0_13, %c0_14] : memref<1x128xf32, #tpu.memory_space<vmem>>, vector<1x128xf32>
    %23 = vector.broadcast %22 : vector<1x128xf32> to vector<128x128xf32>
    %24 = arith.addf %21, %23 : vector<128x128xf32>
    %25 = tpu.iota {dimensions = array<i32: 1>} : vector<128x128xi32>
    %c5_i32 = arith.constant 5 : i32
    %26 = vector.broadcast %c5_i32 : i32 to vector<128x128xi32>
    %27 = arith.cmpi slt, %25, %26 : vector<128x128xi32>
    %cst_15 = arith.constant -1.000000e+30 : f32
    %28 = vector.broadcast %cst_15 : f32 to vector<128x128xf32>
    %29 = arith.select %27, %24, %28 : vector<128x128xi1>, vector<128x128xf32>
    %cst_16 = arith.constant dense<0xFF800000> : vector<128xf32>
    %30 = vector.multi_reduction <maximumf>, %29, %cst_16 [1] : vector<128x128xf32> to vector<128xf32>
    %31 = vector.shape_cast %30 : vector<128xf32> to vector<128x1xf32>
    %32 = vector.broadcast %31 : vector<128x1xf32> to vector<128x128xf32>
    %33 = arith.subf %29, %32 : vector<128x128xf32>
    %34 = math.exp %33 : vector<128x128xf32>
    %cst_17 = arith.constant dense<0.000000e+00> : vector<128xf32>
    %35 = vector.multi_reduction <add>, %34, %cst_17 [1] : vector<128x128xf32> to vector<128xf32>
    %36 = vector.shape_cast %35 : vector<128xf32> to vector<128x1xf32>
    %37 = math.log %36 : vector<128x1xf32>
    %38 = vector.broadcast %31 : vector<128x1xf32> to vector<128x128xf32>
    %39 = arith.subf %29, %38 : vector<128x128xf32>
    %40 = vector.broadcast %37 : vector<128x1xf32> to vector<128x128xf32>
    %41 = arith.subf %39, %40 : vector<128x128xf32>
    %cst_18 = arith.constant 0.000000e+00 : f32
    %42 = vector.broadcast %cst_18 : f32 to vector<128x128xf32>
    %43 = arith.select %27, %41, %42 : vector<128x128xi1>, vector<128x128xf32>
    %c0_19 = arith.constant 0 : index
    %c0_20 = arith.constant 0 : index
    %44 = vector.load %arg7[%c0_19, %c0_20] : memref<128x128xf32, #tpu.memory_space<vmem>>, vector<128x128xf32>
    tpu.vector_store %arg7[%c0_19, %c0_20], %43 {strides = array<i32>} : memref<128x128xf32, #tpu.memory_space<vmem>>, vector<128x128xf32>,
    return
  }
  func.func @transform_0(%arg0: i32) -> (i32, i32) {
    %c0_i32 = arith.constant 0 : i32
    %c0_i32_0 = arith.constant 0 : i32
    %c0_i32_1 = arith.constant 0 : i32
    return %c0_i32, %c0_i32_0 : i32, i32
  }
  func.func @transform_1(%arg0: i32) -> (i32, i32) {
    %c0_i32 = arith.constant 0 : i32
    %c0_i32_0 = arith.constant 0 : i32
    %c0_i32_1 = arith.constant 0 : i32
    return %c0_i32, %c0_i32_0 : i32, i32
  }
  func.func @transform_2(%arg0: i32) -> (i32, i32) {
    %c0_i32 = arith.constant 0 : i32
    %c0_i32_0 = arith.constant 0 : i32
    %c0_i32_1 = arith.constant 0 : i32
    return %c0_i32, %c0_i32_0 : i32, i32
  }
  func.func @transform_3(%arg0: i32) -> (i32, i32) {
    %c0_i32 = arith.constant 0 : i32
    %c0_i32_0 = arith.constant 0 : i32
    %c0_i32_1 = arith.constant 0 : i32
    return %c0_i32, %c0_i32_0 : i32, i32
  }
  func.func @transform_4(%arg0: i32) -> (i32, i32) {
    %c0_i32 = arith.constant 0 : i32
    %c0_i32_0 = arith.constant 0 : i32
    %c0_i32_1 = arith.constant 0 : i32
    return %c0_i32, %c0_i32_0 : i32, i32
  }
  func.func @transform_5(%arg0: i32) -> (i32, i32) {
    %c0_i32 = arith.constant 0 : i32
    %c0_i32_0 = arith.constant 0 : i32
    %c0_i32_1 = arith.constant 0 : i32
    return %c0_i32, %c0_i32_0 : i32, i32
  }
  func.func @transform_6(%arg0: i32) -> (i32, i32) {
    %c0_i32 = arith.constant 0 : i32
    %c0_i32_0 = arith.constant 0 : i32
    %c0_i32_1 = arith.constant 0 : i32
    return %c0_i32, %c0_i32_0 : i32, i32
  }
}

</mosaic_0001>

<llo_original>
// kernel: p1gcn_forward.1
$region0: #{p1gcn_forward.1}
  #allocation0 [shape = 'u32[]', space=smem, size = 0x4, offset = 0x4, fixed_abs, tag = 'smem constant byte address 0x4 - core index']
  #allocation1 [shape = 'u32[144,128]{1,0:T(1,128)}', space=vmem, size = 0x12000, scoped, tag = 'internal scratch']
  %s0 = inlined_call_operand.vmem [shape: bf16[128,128], index: 0, kind: input, shape index: {}]
  %s1 = inlined_call_operand.vmem [shape: bf16[128,128], index: 1, kind: input, shape index: {}]
  %s2 = inlined_call_operand.vmem [shape: bf16[128,256], index: 2, kind: input, shape index: {}]
  %s3 = inlined_call_operand.vmem [shape: f32[1,128], index: 3, kind: input, shape index: {}]
  %s4 = inlined_call_operand.vmem [shape: bf16[128,256], index: 4, kind: input, shape index: {}]
  %s5 = inlined_call_operand.vmem [shape: f32[1,128], index: 5, kind: input, shape index: {}]
  %s6 = inlined_call_operand.vmem [shape: f32[128,128], index: 6, kind: output, shape index: {}]
  %s7 = sld [smem:[#allocation0]]
  $region34: #{p1gcn_forward.1} parent=0
    _
  %s9 = ssub.s32 1, %s7
  %s10 = scalar_select 0, %s9, %s7
  // Predicated region
  $region2: #{p1gcn_forward.1} parent=0 // pred_check
    _
  $region3: #{p1gcn_forward.1} parent=0 // pred_check_branch
    %12 = sbr.rel (0) target = $region5
  $region4: #{p1gcn_forward.1} parent=0 // pred_region
    _
  $region5: #{p1gcn_forward.1} parent=0 // pred_fallthru
    _
  // Predicated region
  $region6: #{p1gcn_forward.1} parent=0 // pred_check
    _
  $region7: #{p1gcn_forward.1} parent=0 // pred_check_branch
    %14 = sbr.rel (0) target = $region9
  $region8: #{p1gcn_forward.1} parent=0 // pred_region
    _
  $region9: #{p1gcn_forward.1} parent=0 // pred_fallthru
    _
  // Predicated region
  $region10: #{p1gcn_forward.1} parent=0 // pred_check
    _
  $region11: #{p1gcn_forward.1} parent=0 // pred_check_branch
    %16 = sbr.rel (0) target = $region13
  $region12: #{p1gcn_forward.1} parent=0 // pred_region
    _
  $region13: #{p1gcn_forward.1} parent=0 // pred_fallthru
    _
  // Predicated region
  $region14: #{p1gcn_forward.1} parent=0 // pred_check
    _
  $region15: #{p1gcn_forward.1} parent=0 // pred_check_branch
    %18 = sbr.rel (0) target = $region17
  $region16: #{p1gcn_forward.1} parent=0 // pred_region
    _
  $region17: #{p1gcn_forward.1} parent=0 // pred_fallthru
    _
  // Predicated region
  $region18: #{p1gcn_forward.1} parent=0 // pred_check
    _
  $region19: #{p1gcn_forward.1} parent=0 // pred_check_branch
    %20 = sbr.rel (0) target = $region21
  $region20: #{p1gcn_forward.1} parent=0 // pred_region
    _
  $region21: #{p1gcn_forward.1} parent=0 // pred_fallthru
    _
  // Predicated region
  $region22: #{p1gcn_forward.1} parent=0 // pred_check
    _
  $region23: #{p1gcn_forward.1} parent=0 // pred_check_branch
    %22 = sbr.rel (0) target = $region25
  $region24: #{p1gcn_forward.1} parent=0 // pred_region
    _
  $region25: #{p1gcn_forward.1} parent=0 // pred_fallthru
    _
  %v24 = vld [vmem:[%s0] sm:$0xf]
  %v25 = vld [vmem:[%s0 + $0x4] sm:$0xf]
  %v26 = vld [vmem:[%s0 + $0x8] sm:$0xf]
  %v27 = vld [vmem:[%s0 + $0xc] sm:$0xf]
  %v28 = vld [vmem:[%s0 + $0x10] sm:$0xf]
  %v29 = vld [vmem:[%s0 + $0x14] sm:$0xf]
  %v30 = vld [vmem:[%s0 + $0x18] sm:$0xf]
  %v31 = vld [vmem:[%s0 + $0x1c] sm:$0xf]
  %v32 = vld [vmem:[%s0 + $0x20] sm:$0xf]
  %v33 = vld [vmem:[%s0 + $0x24] sm:$0xf]
  %v34 = vld [vmem:[%s0 + $0x28] sm:$0xf]
  %v35 = vld [vmem:[%s0 + $0x2c] sm:$0xf]
  %v36 = vld [vmem:[%s0 + $0x30] sm:$0xf]
  %v37 = vld [vmem:[%s0 + $0x34] sm:$0xf]
  %v38 = vld [vmem:[%s0 + $0x38] sm:$0xf]
  %v39 = vld [vmem:[%s0 + $0x3c] sm:$0xf]
  %v40 = vld [vmem:[%s1] sm:$0xf]
  %v41 = vld [vmem:[%s1 + $0x4] sm:$0xf]
  %v42 = vld [vmem:[%s1 + $0x8] sm:$0xf]
  %v43 = vld [vmem:[%s1 + $0xc] sm:$0xf]
  %v44 = vld [vmem:[%s1 + $0x10] sm:$0xf]
  %v45 = vld [vmem:[%s1 + $0x14] sm:$0xf]
  %v46 = vld [vmem:[%s1 + $0x18] sm:$0xf]
  %v47 = vld [vmem:[%s1 + $0x1c] sm:$0xf]
  %v48 = vld [vmem:[%s1 + $0x20] sm:$0xf]
  %v49 = vld [vmem:[%s1 + $0x24] sm:$0xf]
  %v50 = vld [vmem:[%s1 + $0x28] sm:$0xf]
  %v51 = vld [vmem:[%s1 + $0x2c] sm:$0xf]
  %v52 = vld [vmem:[%s1 + $0x30] sm:$0xf]
  %v53 = vld [vmem:[%s1 + $0x34] sm:$0xf]
  %v54 = vld [vmem:[%s1 + $0x38] sm:$0xf]
  %v55 = vld [vmem:[%s1 + $0x3c] sm:$0xf]
  %v56 = vld [vmem:[%s2] sm:$0xff]
  %v57 = vld [vmem:[%s2 + $0x8] sm:$0xff]
  %v58 = vld [vmem:[%s2 + $0x10] sm:$0xff]
  %v59 = vld [vmem:[%s2 + $0x18] sm:$0xff]
  %v60 = vld [vmem:[%s2 + $0x20] sm:$0xff]
  %v61 = vld [vmem:[%s2 + $0x28] sm:$0xff]
  %v62 = vld [vmem:[%s2 + $0x30] sm:$0xff]
  %v63 = vld [vmem:[%s2 + $0x38] sm:$0xff]
  %v64 = vld [vmem:[%s2 + $0x40] sm:$0xff]
  %v65 = vld [vmem:[%s2 + $0x48] sm:$0xff]
  %v66 = vld [vmem:[%s2 + $0x50] sm:$0xff]
  %v67 = vld [vmem:[%s2 + $0x58] sm:$0xff]
  %v68 = vld [vmem:[%s2 + $0x60] sm:$0xff]
  %v69 = vld [vmem:[%s2 + $0x68] sm:$0xff]
  %v70 = vld [vmem:[%s2 + $0x70] sm:$0xff]
  %v71 = vld [vmem:[%s2 + $0x78] sm:$0xff]
  %v88 = vunpack.c.l.b16 %v24
  %v89 = vunpack.c.l.b16 %v25
  %v90 = vunpack.c.l.b16 %v26
  %v91 = vunpack.c.l.b16 %v27
  %v92 = vunpack.c.l.b16 %v28
  %v93 = vunpack.c.l.b16 %v29
  %v94 = vunpack.c.l.b16 %v30
  %v95 = vunpack.c.l.b16 %v31
  %v96 = vunpack.c.l.b16 %v32
  %v97 = vunpack.c.l.b16 %v33
  %v98 = vunpack.c.l.b16 %v34
  %v99 = vunpack.c.l.b16 %v35
  %v100 = vunpack.c.l.b16 %v36
  %v101 = vunpack.c.l.b16 %v37
  %v102 = vunpack.c.l.b16 %v38
  %v103 = vunpack.c.l.b16 %v39
  %v104 = vpack.c.b16 %v89, %v88
  %v105 = vpack.c.b16 %v91, %v90
  %v106 = vpack.c.b16 %v93, %v92
  %v107 = vpack.c.b16 %v95, %v94
  %v108 = vpack.c.b16 %v97, %v96
  %v109 = vpack.c.b16 %v99, %v98
  %v110 = vpack.c.b16 %v101, %v100
  %v111 = vpack.c.b16 %v103, %v102
  %v136 = vunpack.c.l.b16 %v56
  %v137 = vunpack.c.h.b16 %v56
  %v138 = vunpack.c.l.b16 %v57
  %v139 = vunpack.c.h.b16 %v57
  %v140 = vunpack.c.l.b16 %v58
  %v141 = vunpack.c.h.b16 %v58
  %v142 = vunpack.c.l.b16 %v59
  %v143 = vunpack.c.h.b16 %v59
  %v144 = vunpack.c.l.b16 %v60
  %v145 = vunpack.c.h.b16 %v60
  %v146 = vunpack.c.l.b16 %v61
  %v147 = vunpack.c.h.b16 %v61
  %v148 = vunpack.c.l.b16 %v62
  %v149 = vunpack.c.h.b16 %v62
  %v150 = vunpack.c.l.b16 %v63
  %v151 = vunpack.c.h.b16 %v63
  %v152 = vunpack.c.l.b16 %v64
  %v153 = vunpack.c.h.b16 %v64
  %v154 = vunpack.c.l.b16 %v65
  %v155 = vunpack.c.h.b16 %v65
  %v156 = vunpack.c.l.b16 %v66
  %v157 = vunpack.c.h.b16 %v66
  %v158 = vunpack.c.l.b16 %v67
  %v159 = vunpack.c.h.b16 %v67
  %v160 = vunpack.c.l.b16 %v68
  %v161 = vunpack.c.h.b16 %v68
  %v162 = vunpack.c.l.b16 %v69
  %v163 = vunpack.c.h.b16 %v69
  %v164 = vunpack.c.l.b16 %v70
  %v165 = vunpack.c.h.b16 %v70
  %v166 = vunpack.c.l.b16 %v71
  %v167 = vunpack.c.h.b16 %v71
  %v168 = vpack.c.b16 %v138, %v136
  %v169 = vpack.c.b16 %v139, %v137
  %v170 = vpack.c.b16 %v142, %v140
  %v171 = vpack.c.b16 %v143, %v141
  %v172 = vpack.c.b16 %v146, %v144
  %v173 = vpack.c.b16 %v147, %v145
  %v174 = vpack.c.b16 %v150, %v148
  %v175 = vpack.c.b16 %v151, %v149
  %v176 = vpack.c.b16 %v154, %v152
  %v177 = vpack.c.b16 %v155, %v153
  %v178 = vpack.c.b16 %v158, %v156
  %v179 = vpack.c.b16 %v159, %v157
  %v180 = vpack.c.b16 %v162, %v160
  %v181 = vpack.c.b16 %v163, %v161
  %v182 = vpack.c.b16 %v166, %v164
  %v183 = vpack.c.b16 %v167, %v165
  %200 = vmatprep.subr.bf16.mxu0 %v183
  %201 = vmatpush1.bf16.msra.mxu0 %v182
  %202 = vmatprep.subr.bf16.mxu0 %v181
  %203 = vmatpush1.bf16.msra.mxu0 %v180
  %204 = vmatprep.subr.bf16.mxu0 %v179
  %205 = vmatpush1.bf16.msra.mxu0 %v178
  %206 = vmatprep.subr.bf16.mxu0 %v177
  %207 = vmatpush1.bf16.msra.mxu0 %v176
  %208 = vmatprep.subr.bf16.mxu0 %v175
  %209 = vmatpush1.bf16.msra.mxu0 %v174
  %210 = vmatprep.subr.bf16.mxu0 %v173
  %211 = vmatpush1.bf16.msra.mxu0 %v172
  %212 = vmatprep.subr.bf16.mxu0 %v171
  %213 = vmatpush1.bf16.msra.mxu0 %v170
  %214 = vmatprep.subr.bf16.mxu0 %v169
  %215 = vmatpush1.bf16.msra.mxu0 %v168
  %216 = vmatprep.subr.bf16.mxu0 0
  %217 = vmatpush2.bf16.msra.mxu0 0
  %218 = vmatprep.subr.bf16.mxu0 0
  %219 = vmatpush2.bf16.msra.mxu0 0
  %220 = vmatprep.subr.bf16.mxu0 0
  %221 = vmatpush2.bf16.msra.mxu0 0
  %222 = vmatprep.subr.bf16.mxu0 0
  %223 = vmatpush2.bf16.msra.mxu0 0
  %224 = vmatprep.subr.bf16.mxu0 0
  %225 = vmatpush2.bf16.msra.mxu0 0
  %226 = vmatprep.subr.bf16.mxu0 0
  %227 = vmatpush2.bf16.msra.mxu0 0
  %228 = vmatprep.subr.bf16.mxu0 0
  %229 = vmatpush2.bf16.msra.mxu0 0
  %230 = vmatprep.subr.bf16.mxu0 0
  %231 = vmatpush2.bf16.msra.mxu0 0
  %232 = vmatprep.mubr.bf16.mxu0 0
  %233 = vmatmul.mubr.bf16.gmra.mxu0 %v104
  %v234 = vpop.f32.mrf.mxu0
  %v235 = vadd.f32 0.0, %v234
  %v236 = vpop.f32.mrf.mxu0
  %v237 = vadd.f32 0.0, %v236
  %v238 = vpop.f32.mrf.mxu0
  %v239 = vadd.f32 0.0, %v238
  %v240 = vpop.f32.mrf.mxu0
  %v241 = vadd.f32 0.0, %v240
  %242 = vmatprep.mubr.bf16.mxu0 0
  %243 = vmatmul.mubr.bf16.gmra.mxu0 %v105
  %v244 = vpop.f32.mrf.mxu0
  %v245 = vadd.f32 0.0, %v244
  %v246 = vpop.f32.mrf.mxu0
  %v247 = vadd.f32 0.0, %v246
  %v248 = vpop.f32.mrf.mxu0
  %v249 = vadd.f32 0.0, %v248
  %v250 = vpop.f32.mrf.mxu0
  %v251 = vadd.f32 0.0, %v250
  %252 = vmatprep.mubr.bf16.mxu0 0
  %253 = vmatmul.mubr.bf16.gmra.mxu0 %v106
  %v254 = vpop.f32.mrf.mxu0
  %v255 = vadd.f32 0.0, %v254
  %v256 = vpop.f32.mrf.mxu0
  %v257 = vadd.f32 0.0, %v256
  %v258 = vpop.f32.mrf.mxu0
  %v259 = vadd.f32 0.0, %v258
  %v260 = vpop.f32.mrf.mxu0
  %v261 = vadd.f32 0.0, %v260
  %262 = vmatprep.mubr.bf16.mxu0 0
  %263 = vmatmul.mubr.bf16.gmra.mxu0 %v107
  %v264 = vpop.f32.mrf.mxu0
  %v265 = vadd.f32 0.0, %v264
  %v266 = vpop.f32.mrf.mxu0
  %v267 = vadd.f32 0.0, %v266
  %v268 = vpop.f32.mrf.mxu0
  %v269 = vadd.f32 0.0, %v268
  %v270 = vpop.f32.mrf.mxu0
  %v271 = vadd.f32 0.0, %v270
  %272 = vmatprep.mubr.bf16.mxu0 0
  %273 = vmatmul.mubr.bf16.gmra.mxu0 %v108
  %v274 = vpop.f32.mrf.mxu0
  %v275 = vadd.f32 0.0, %v274
  %v276 = vpop.f32.mrf.mxu0
  %v277 = vadd.f32 0.0, %v276
  %v278 = vpop.f32.mrf.mxu0
  %v279 = vadd.f32 0.0, %v278
  %v280 = vpop.f32.mrf.mxu0
  %v281 = vadd.f32 0.0, %v280
  %282 = vmatprep.mubr.bf16.mxu0 0
  %283 = vmatmul.mubr.bf16.gmra.mxu0 %v109
  %v284 = vpop.f32.mrf.mxu0
  %v285 = vadd.f32 0.0, %v284
  %v286 = vpop.f32.mrf.mxu0
  %v287 = vadd.f32 0.0, %v286
  %v288 = vpop.f32.mrf.mxu0
  %v289 = vadd.f32 0.0, %v288
  %v290 = vpop.f32.mrf.mxu0
  %v291 = vadd.f32 0.0, %v290
  %292 = vmatprep.mubr.bf16.mxu0 0
  %293 = vmatmul.mubr.bf16.gmra.mxu0 %v110
  %v294 = vpop.f32.mrf.mxu0
  %v295 = vadd.f32 0.0, %v294
  %v296 = vpop.f32.mrf.mxu0
  %v297 = vadd.f32 0.0, %v296
  %v298 = vpop.f32.mrf.mxu0
  %v299 = vadd.f32 0.0, %v298
  %v300 = vpop.f32.mrf.mxu0
  %v301 = vadd.f32 0.0, %v300
  %302 = vmatprep.mubr.bf16.mxu0 0
  %303 = vmatmul.mubr.bf16.gmra.mxu0 %v111
  %v304 = vpop.f32.mrf.mxu0
  %v305 = vadd.f32 0.0, %v304
  %v306 = vpop.f32.mrf.mxu0
  %v307 = vadd.f32 0.0, %v306
  %v308 = vpop.f32.mrf.mxu0
  %v309 = vadd.f32 0.0, %v308
  %v310 = vpop.f32.mrf.mxu0
  %v311 = vadd.f32 0.0, %v310
  %312 = vdwg.mxu0
  %v313 = vpack.c.bf16 %v241, %v237
  %v314 = vpack.c.bf16 %v251, %v247
  %v315 = vpack.c.bf16 %v261, %v257
  %v316 = vpack.c.bf16 %v271, %v267
  %v317 = vpack.c.bf16 %v281, %v277
  %v318 = vpack.c.bf16 %v291, %v287
  %v319 = vpack.c.bf16 %v301, %v297
  %v320 = vpack.c.bf16 %v311, %v307
  %v337 = vunpack.c.l.b16 %v40
  %v338 = vunpack.c.l.b16 %v41
  %v339 = vunpack.c.l.b16 %v42
  %v340 = vunpack.c.l.b16 %v43
  %v341 = vunpack.c.l.b16 %v44
  %v342 = vunpack.c.l.b16 %v45
  %v343 = vunpack.c.l.b16 %v46
  %v344 = vunpack.c.l.b16 %v47
  %v345 = vunpack.c.l.b16 %v48
  %v346 = vunpack.c.l.b16 %v49
  %v347 = vunpack.c.l.b16 %v50
  %v348 = vunpack.c.l.b16 %v51
  %v349 = vunpack.c.l.b16 %v52
  %v350 = vunpack.c.l.b16 %v53
  %v351 = vunpack.c.l.b16 %v54
  %v352 = vunpack.c.l.b16 %v55
  %v353 = vpack.c.b16 %v338, %v337
  %v354 = vpack.c.b16 %v340, %v339
  %v355 = vpack.c.b16 %v342, %v341
  %v356 = vpack.c.b16 %v344, %v343
  %v357 = vpack.c.b16 %v346, %v345
  %v358 = vpack.c.b16 %v348, %v347
  %v359 = vpack.c.b16 %v350, %v349
  %v360 = vpack.c.b16 %v352, %v351
  %369 = vmatprep.subr.bf16.mxu0 0
  %370 = vmatpush1.bf16.msra.mxu0 %v320
  %371 = vmatprep.subr.bf16.mxu0 0
  %372 = vmatpush1.bf16.msra.mxu0 %v319
  %373 = vmatprep.subr.bf16.mxu0 0
  %374 = vmatpush1.bf16.msra.mxu0 %v318
  %375 = vmatprep.subr.bf16.mxu0 0
  %376 = vmatpush1.bf16.msra.mxu0 %v317
  %377 = vmatprep.subr.bf16.mxu0 0
  %378 = vmatpush1.bf16.msra.mxu0 %v316
  %379 = vmatprep.subr.bf16.mxu0 0
  %380 = vmatpush1.bf16.msra.mxu0 %v315
  %381 = vmatprep.subr.bf16.mxu0 0
  %382 = vmatpush1.bf16.msra.mxu0 %v314
  %383 = vmatprep.subr.bf16.mxu0 0
  %384 = vmatpush1.bf16.msra.mxu0 %v313
  %385 = vmatprep.subr.bf16.mxu0 0
  %386 = vmatpush2.bf16.msra.mxu0 0
  %387 = vmatprep.subr.bf16.mxu0 0
  %388 = vmatpush2.bf16.msra.mxu0 0
  %389 = vmatprep.subr.bf16.mxu0 0
  %390 = vmatpush2.bf16.msra.mxu0 0
  %391 = vmatprep.subr.bf16.mxu0 0
  %392 = vmatpush2.bf16.msra.mxu0 0
  %393 = vmatprep.subr.bf16.mxu0 0
  %394 = vmatpush2.bf16.msra.mxu0 0
  %395 = vmatprep.subr.bf16.mxu0 0
  %396 = vmatpush2.bf16.msra.mxu0 0
  %397 = vmatprep.subr.bf16.mxu0 0
  %398 = vmatpush2.bf16.msra.mxu0 0
  %399 = vmatprep.subr.bf16.mxu0 0
  %400 = vmatpush2.bf16.msra.mxu0 0
  %401 = vmatprep.mubr.bf16.mxu0 0
  %402 = vmatmul.mubr.bf16.gmra.mxu0 %v353
  %v403 = vpop.f32.mrf.mxu0
  %v404 = vadd.f32 0.0, %v403
  %v405 = vpop.f32.mrf.mxu0
  %v406 = vpop.f32.mrf.mxu0
  %v407 = vadd.f32 0.0, %v406
  %v408 = vpop.f32.mrf.mxu0
  %409 = vmatprep.mubr.bf16.mxu0 0
  %410 = vmatmul.mubr.bf16.gmra.mxu0 %v354
  %v411 = vpop.f32.mrf.mxu0
  %v412 = vadd.f32 0.0, %v411
  %v413 = vpop.f32.mrf.mxu0
  %v414 = vpop.f32.mrf.mxu0
  %v415 = vadd.f32 0.0, %v414
  %v416 = vpop.f32.mrf.mxu0
  %417 = vmatprep.mubr.bf16.mxu0 0
  %418 = vmatmul.mubr.bf16.gmra.mxu0 %v355
  %v419 = vpop.f32.mrf.mxu0
  %v420 = vadd.f32 0.0, %v419
  %v421 = vpop.f32.mrf.mxu0
  %v422 = vpop.f32.mrf.mxu0
  %v423 = vadd.f32 0.0, %v422
  %v424 = vpop.f32.mrf.mxu0
  %425 = vmatprep.mubr.bf16.mxu0 0
  %426 = vmatmul.mubr.bf16.gmra.mxu0 %v356
  %v427 = vpop.f32.mrf.mxu0
  %v428 = vadd.f32 0.0, %v427
  %v429 = vpop.f32.mrf.mxu0
  %v430 = vpop.f32.mrf.mxu0
  %v431 = vadd.f32 0.0, %v430
  %v432 = vpop.f32.mrf.mxu0
  %433 = vmatprep.mubr.bf16.mxu0 0
  %434 = vmatmul.mubr.bf16.gmra.mxu0 %v357
  %v435 = vpop.f32.mrf.mxu0
  %v436 = vadd.f32 0.0, %v435
  %v437 = vpop.f32.mrf.mxu0
  %v438 = vpop.f32.mrf.mxu0
  %v439 = vadd.f32 0.0, %v438
  %v440 = vpop.f32.mrf.mxu0
  %441 = vmatprep.mubr.bf16.mxu0 0
  %442 = vmatmul.mubr.bf16.gmra.mxu0 %v358
  %v443 = vpop.f32.mrf.mxu0
  %v444 = vadd.f32 0.0, %v443
  %v445 = vpop.f32.mrf.mxu0
  %v446 = vpop.f32.mrf.mxu0
  %v447 = vadd.f32 0.0, %v446
  %v448 = vpop.f32.mrf.mxu0
  %449 = vmatprep.mubr.bf16.mxu0 0
  %450 = vmatmul.mubr.bf16.gmra.mxu0 %v359
  %v451 = vpop.f32.mrf.mxu0
  %v452 = vadd.f32 0.0, %v451
  %v453 = vpop.f32.mrf.mxu0
  %v454 = vpop.f32.mrf.mxu0
  %v455 = vadd.f32 0.0, %v454
  %v456 = vpop.f32.mrf.mxu0
  %457 = vmatprep.mubr.bf16.mxu0 0
  %458 = vmatmul.mubr.bf16.gmra.mxu0 %v360
  %v459 = vpop.f32.mrf.mxu0
  %v460 = vadd.f32 0.0, %v459
  %v461 = vpop.f32.mrf.mxu0
  %v462 = vpop.f32.mrf.mxu0
  %v463 = vadd.f32 0.0, %v462
  %v464 = vpop.f32.mrf.mxu0
  %465 = vdwg.mxu0
  %v466 = vadd.f32 %v235, %v404
  %v467 = vadd.f32 %v239, %v407
  %v468 = vadd.f32 %v245, %v412
  %v469 = vadd.f32 %v249, %v415
  %v470 = vadd.f32 %v255, %v420
  %v471 = vadd.f32 %v259, %v423
  %v472 = vadd.f32 %v265, %v428
  %v473 = vadd.f32 %v269, %v431
  %v474 = vadd.f32 %v275, %v436
  %v475 = vadd.f32 %v279, %v439
  %v476 = vadd.f32 %v285, %v444
  %v477 = vadd.f32 %v289, %v447
  %v478 = vadd.f32 %v295, %v452
  %v479 = vadd.f32 %v299, %v455
  %v480 = vadd.f32 %v305, %v460
  %v481 = vadd.f32 %v309, %v463
  %v482 = vld [vmem:[%s3] sm:$0x1]
  %v484 = vlaneseq
  %v485 = vshrl.u32 %v484, 7
  %v486 = vsub.s32 0, %v485
  %v487 = vrot.slane %v482, %v486
  %v489 = vadd.f32 %v466, %v487
  %v490 = vadd.f32 %v467, %v487
  %v491 = vadd.f32 %v468, %v487
  %v492 = vadd.f32 %v469, %v487
  %v493 = vadd.f32 %v470, %v487
  %v494 = vadd.f32 %v471, %v487
  %v495 = vadd.f32 %v472, %v487
  %v496 = vadd.f32 %v473, %v487
  %v497 = vadd.f32 %v474, %v487
  %v498 = vadd.f32 %v475, %v487
  %v499 = vadd.f32 %v476, %v487
  %v500 = vadd.f32 %v477, %v487
  %v501 = vadd.f32 %v478, %v487
  %v502 = vadd.f32 %v479, %v487
  %v503 = vadd.f32 %v480, %v487
  %v504 = vadd.f32 %v481, %v487
  %v505 = vmax.f32 %v489, 0.0
  %v506 = vmax.f32 %v490, 0.0
  %v507 = vmax.f32 %v491, 0.0
  %v508 = vmax.f32 %v492, 0.0
  %v509 = vmax.f32 %v493, 0.0
  %v510 = vmax.f32 %v494, 0.0
  %v511 = vmax.f32 %v495, 0.0
  %v512 = vmax.f32 %v496, 0.0
  %v513 = vmax.f32 %v497, 0.0
  %v514 = vmax.f32 %v498, 0.0
  %v515 = vmax.f32 %v499, 0.0
  %v516 = vmax.f32 %v500, 0.0
  %v517 = vmax.f32 %v501, 0.0
  %v518 = vmax.f32 %v502, 0.0
  %v519 = vmax.f32 %v503, 0.0
  %v520 = vmax.f32 %v504, 0.0
  %v521 = vpack.c.bf16 %v506, %v505
  %v522 = vpack.c.bf16 %v508, %v507
  %v523 = vpack.c.bf16 %v510, %v509
  %v524 = vpack.c.bf16 %v512, %v511
  %v525 = vpack.c.bf16 %v514, %v513
  %v526 = vpack.c.bf16 %v516, %v515
  %v527 = vpack.c.bf16 %v518, %v517
  %v528 = vpack.c.bf16 %v520, %v519
  %v529 = vld [vmem:[%s4] sm:$0xff]
  %v530 = vld [vmem:[%s4 + $0x8] sm:$0xff]
  %v531 = vld [vmem:[%s4 + $0x10] sm:$0xff]
  %v532 = vld [vmem:[%s4 + $0x18] sm:$0xff]
  %v533 = vld [vmem:[%s4 + $0x20] sm:$0xff]
  %v534 = vld [vmem:[%s4 + $0x28] sm:$0xff]
  %v535 = vld [vmem:[%s4 + $0x30] sm:$0xff]
  %v536 = vld [vmem:[%s4 + $0x38] sm:$0xff]
  %v537 = vld [vmem:[%s4 + $0x40] sm:$0xff]
  %v538 = vld [vmem:[%s4 + $0x48] sm:$0xff]
  %v539 = vld [vmem:[%s4 + $0x50] sm:$0xff]
  %v540 = vld [vmem:[%s4 + $0x58] sm:$0xff]
  %v541 = vld [vmem:[%s4 + $0x60] sm:$0xff]
  %v542 = vld [vmem:[%s4 + $0x68] sm:$0xff]
  %v543 = vld [vmem:[%s4 + $0x70] sm:$0xff]
  %v544 = vld [vmem:[%s4 + $0x78] sm:$0xff]
  %v561 = vunpack.c.l.b16 %v529
  %v562 = vunpack.c.h.b16 %v529
  %v563 = vunpack.c.l.b16 %v530
  %v564 = vunpack.c.h.b16 %v530
  %v565 = vunpack.c.l.b16 %v531
  %v566 = vunpack.c.h.b16 %v531
  %v567 = vunpack.c.l.b16 %v532
  %v568 = vunpack.c.h.b16 %v532
  %v569 = vunpack.c.l.b16 %v533
  %v570 = vunpack.c.h.b16 %v533
  %v571 = vunpack.c.l.b16 %v534
  %v572 = vunpack.c.h.b16 %v534
  %v573 = vunpack.c.l.b16 %v535
  %v574 = vunpack.c.h.b16 %v535
  %v575 = vunpack.c.l.b16 %v536
  %v576 = vunpack.c.h.b16 %v536
  %v577 = vunpack.c.l.b16 %v537
  %v578 = vunpack.c.h.b16 %v537
  %v579 = vunpack.c.l.b16 %v538
  %v580 = vunpack.c.h.b16 %v538
  %v581 = vunpack.c.l.b16 %v539
  %v582 = vunpack.c.h.b16 %v539
  %v583 = vunpack.c.l.b16 %v540
  %v584 = vunpack.c.h.b16 %v540
  %v585 = vunpack.c.l.b16 %v541
  %v586 = vunpack.c.h.b16 %v541
  %v587 = vunpack.c.l.b16 %v542
  %v588 = vunpack.c.h.b16 %v542
  %v589 = vunpack.c.l.b16 %v543
  %v590 = vunpack.c.h.b16 %v543
  %v591 = vunpack.c.l.b16 %v544
  %v592 = vunpack.c.h.b16 %v544
  %v593 = vpack.c.b16 %v563, %v561
  %v594 = vpack.c.b16 %v564, %v562
  %v595 = vpack.c.b16 %v567, %v565
  %v596 = vpack.c.b16 %v568, %v566
  %v597 = vpack.c.b16 %v571, %v569
  %v598 = vpack.c.b16 %v572, %v570
  %v599 = vpack.c.b16 %v575, %v573
  %v600 = vpack.c.b16 %v576, %v574
  %v601 = vpack.c.b16 %v579, %v577
  %v602 = vpack.c.b16 %v580, %v578
  %v603 = vpack.c.b16 %v583, %v581
  %v604 = vpack.c.b16 %v584, %v582
  %v605 = vpack.c.b16 %v587, %v585
  %v606 = vpack.c.b16 %v588, %v586
  %v607 = vpack.c.b16 %v591, %v589
  %v608 = vpack.c.b16 %v592, %v590
  %625 = vmatprep.subr.bf16.mxu0 %v608
  %626 = vmatpush1.bf16.msra.mxu0 %v607
  %627 = vmatprep.subr.bf16.mxu0 %v606
  %628 = vmatpush1.bf16.msra.mxu0 %v605
  %629 = vmatprep.subr.bf16.mxu0 %v604
  %630 = vmatpush1.bf16.msra.mxu0 %v603
  %631 = vmatprep.subr.bf16.mxu0 %v602
  %632 = vmatpush1.bf16.msra.mxu0 %v601
  %633 = vmatprep.subr.bf16.mxu0 %v600
  %634 = vmatpush1.bf16.msra.mxu0 %v599
  %635 = vmatprep.subr.bf16.mxu0 %v598
  %636 = vmatpush1.bf16.msra.mxu0 %v597
  %637 = vmatprep.subr.bf16.mxu0 %v596
  %638 = vmatpush1.bf16.msra.mxu0 %v595
  %639 = vmatprep.subr.bf16.mxu0 %v594
  %640 = vmatpush1.bf16.msra.mxu0 %v593
  %641 = vmatprep.subr.bf16.mxu0 0
  %642 = vmatpush2.bf16.msra.mxu0 0
  %643 = vmatprep.subr.bf16.mxu0 0
  %644 = vmatpush2.bf16.msra.mxu0 0
  %645 = vmatprep.subr.bf16.mxu0 0
  %646 = vmatpush2.bf16.msra.mxu0 0
  %647 = vmatprep.subr.bf16.mxu0 0
  %648 = vmatpush2.bf16.msra.mxu0 0
  %649 = vmatprep.subr.bf16.mxu0 0
  %650 = vmatpush2.bf16.msra.mxu0 0
  %651 = vmatprep.subr.bf16.mxu0 0
  %652 = vmatpush2.bf16.msra.mxu0 0
  %653 = vmatprep.subr.bf16.mxu0 0
  %654 = vmatpush2.bf16.msra.mxu0 0
  %655 = vmatprep.subr.bf16.mxu0 0
  %656 = vmatpush2.bf16.msra.mxu0 0
  %657 = vmatprep.mubr.bf16.mxu0 0
  %658 = vmatmul.mubr.bf16.gmra.mxu0 %v521
  %v659 = vpop.f32.mrf.mxu0
  %v660 = vadd.f32 0.0, %v659
  %v661 = vpop.f32.mrf.mxu0
  %v662 = vadd.f32 0.0, %v661
  %v663 = vpop.f32.mrf.mxu0
  %v664 = vadd.f32 0.0, %v663
  %v665 = vpop.f32.mrf.mxu0
  %v666 = vadd.f32 0.0, %v665
  %667 = vmatprep.mubr.bf16.mxu0 0
  %668 = vmatmul.mubr.bf16.gmra.mxu0 %v522
  %v669 = vpop.f32.mrf.mxu0
  %v670 = vadd.f32 0.0, %v669
  %v671 = vpop.f32.mrf.mxu0
  %v672 = vadd.f32 0.0, %v671
  %v673 = vpop.f32.mrf.mxu0
  %v674 = vadd.f32 0.0, %v673
  %v675 = vpop.f32.mrf.mxu0
  %v676 = vadd.f32 0.0, %v675
  %677 = vmatprep.mubr.bf16.mxu0 0
  %678 = vmatmul.mubr.bf16.gmra.mxu0 %v523
  %v679 = vpop.f32.mrf.mxu0
  %v680 = vadd.f32 0.0, %v679
  %v681 = vpop.f32.mrf.mxu0
  %v682 = vadd.f32 0.0, %v681
  %v683 = vpop.f32.mrf.mxu0
  %v684 = vadd.f32 0.0, %v683
  %v685 = vpop.f32.mrf.mxu0
  %v686 = vadd.f32 0.0, %v685
  %687 = vmatprep.mubr.bf16.mxu0 0
  %688 = vmatmul.mubr.bf16.gmra.mxu0 %v524
  %v689 = vpop.f32.mrf.mxu0
  %v690 = vadd.f32 0.0, %v689
  %v691 = vpop.f32.mrf.mxu0
  %v692 = vadd.f32 0.0, %v691
  %v693 = vpop.f32.mrf.mxu0
  %v694 = vadd.f32 0.0, %v693
  %v695 = vpop.f32.mrf.mxu0
  %v696 = vadd.f32 0.0, %v695
  %697 = vmatprep.mubr.bf16.mxu0 0
  %698 = vmatmul.mubr.bf16.gmra.mxu0 %v525
  %v699 = vpop.f32.mrf.mxu0
  %v700 = vadd.f32 0.0, %v699
  %v701 = vpop.f32.mrf.mxu0
  %v702 = vadd.f32 0.0, %v701
  %v703 = vpop.f32.mrf.mxu0
  %v704 = vadd.f32 0.0, %v703
  %v705 = vpop.f32.mrf.mxu0
  %v706 = vadd.f32 0.0, %v705
  %707 = vmatprep.mubr.bf16.mxu0 0
  %708 = vmatmul.mubr.bf16.gmra.mxu0 %v526
  %v709 = vpop.f32.mrf.mxu0
  %v710 = vadd.f32 0.0, %v709
  %v711 = vpop.f32.mrf.mxu0
  %v712 = vadd.f32 0.0, %v711
  %v713 = vpop.f32.mrf.mxu0
  %v714 = vadd.f32 0.0, %v713
  %v715 = vpop.f32.mrf.mxu0
  %v716 = vadd.f32 0.0, %v715
  %717 = vmatprep.mubr.bf16.mxu0 0
  %718 = vmatmul.mubr.bf16.gmra.mxu0 %v527
  %v719 = vpop.f32.mrf.mxu0
  %v720 = vadd.f32 0.0, %v719
  %v721 = vpop.f32.mrf.mxu0
  %v722 = vadd.f32 0.0, %v721
  %v723 = vpop.f32.mrf.mxu0
  %v724 = vadd.f32 0.0, %v723
  %v725 = vpop.f32.mrf.mxu0
  %v726 = vadd.f32 0.0, %v725
  %727 = vmatprep.mubr.bf16.mxu0 0
  %728 = vmatmul.mubr.bf16.gmra.mxu0 %v528
  %v729 = vpop.f32.mrf.mxu0
  %v730 = vadd.f32 0.0, %v729
  %v731 = vpop.f32.mrf.mxu0
  %v732 = vadd.f32 0.0, %v731
  %v733 = vpop.f32.mrf.mxu0
  %v734 = vadd.f32 0.0, %v733
  %v735 = vpop.f32.mrf.mxu0
  %v736 = vadd.f32 0.0, %v735
  %737 = vdwg.mxu0
  %v738 = vpack.c.bf16 %v666, %v662
  %v739 = vpack.c.bf16 %v676, %v672
  %v740 = vpack.c.bf16 %v686, %v682
  %v741 = vpack.c.bf16 %v696, %v692
  %v742 = vpack.c.bf16 %v706, %v702
  %v743 = vpack.c.bf16 %v716, %v712
  %v744 = vpack.c.bf16 %v726, %v722
  %v745 = vpack.c.bf16 %v736, %v732
  %746 = vmatprep.subr.bf16.mxu0 0
  %747 = vmatpush1.bf16.msra.mxu0 %v745
  %748 = vmatprep.subr.bf16.mxu0 0
  %749 = vmatpush1.bf16.msra.mxu0 %v744
  %750 = vmatprep.subr.bf16.mxu0 0
  %751 = vmatpush1.bf16.msra.mxu0 %v743
  %752 = vmatprep.subr.bf16.mxu0 0
  %753 = vmatpush1.bf16.msra.mxu0 %v742
  %754 = vmatprep.subr.bf16.mxu0 0
  %755 = vmatpush1.bf16.msra.mxu0 %v741
  %756 = vmatprep.subr.bf16.mxu0 0
  %757 = vmatpush1.bf16.msra.mxu0 %v740
  %758 = vmatprep.subr.bf16.mxu0 0
  %759 = vmatpush1.bf16.msra.mxu0 %v739
  %760 = vmatprep.subr.bf16.mxu0 0
  %761 = vmatpush1.bf16.msra.mxu0 %v738
  %762 = vmatprep.subr.bf16.mxu0 0
  %763 = vmatpush2.bf16.msra.mxu0 0
  %764 = vmatprep.subr.bf16.mxu0 0
  %765 = vmatpush2.bf16.msra.mxu0 0
  %766 = vmatprep.subr.bf16.mxu0 0
  %767 = vmatpush2.bf16.msra.mxu0 0
  %768 = vmatprep.subr.bf16.mxu0 0
  %769 = vmatpush2.bf16.msra.mxu0 0
  %770 = vmatprep.subr.bf16.mxu0 0
  %771 = vmatpush2.bf16.msra.mxu0 0
  %772 = vmatprep.subr.bf16.mxu0 0
  %773 = vmatpush2.bf16.msra.mxu0 0
  %774 = vmatprep.subr.bf16.mxu0 0
  %775 = vmatpush2.bf16.msra.mxu0 0
  %776 = vmatprep.subr.bf16.mxu0 0
  %777 = vmatpush2.bf16.msra.mxu0 0
  %778 = vmatprep.mubr.bf16.mxu0 0
  %779 = vmatmul.mubr.bf16.gmra.mxu0 %v353
  %v780 = vpop.f32.mrf.mxu0
  %v781 = vadd.f32 0.0, %v780
  %v782 = vpop.f32.mrf.mxu0
  %v783 = vpop.f32.mrf.mxu0
  %v784 = vadd.f32 0.0, %v783
  %v785 = vpop.f32.mrf.mxu0
  %786 = vmatprep.mubr.bf16.mxu0 0
  %787 = vmatmul.mubr.bf16.gmra.mxu0 %v354
  %v788 = vpop.f32.mrf.mxu0
  %v789 = vadd.f32 0.0, %v788
  %v790 = vpop.f32.mrf.mxu0
  %v791 = vpop.f32.mrf.mxu0
  %v792 = vadd.f32 0.0, %v791
  %v793 = vpop.f32.mrf.mxu0
  %794 = vmatprep.mubr.bf16.mxu0 0
  %795 = vmatmul.mubr.bf16.gmra.mxu0 %v355
  %v796 = vpop.f32.mrf.mxu0
  %v797 = vadd.f32 0.0, %v796
  %v798 = vpop.f32.mrf.mxu0
  %v799 = vpop.f32.mrf.mxu0
  %v800 = vadd.f32 0.0, %v799
  %v801 = vpop.f32.mrf.mxu0
  %802 = vmatprep.mubr.bf16.mxu0 0
  %803 = vmatmul.mubr.bf16.gmra.mxu0 %v356
  %v804 = vpop.f32.mrf.mxu0
  %v805 = vadd.f32 0.0, %v804
  %v806 = vpop.f32.mrf.mxu0
  %v807 = vpop.f32.mrf.mxu0
  %v808 = vadd.f32 0.0, %v807
  %v809 = vpop.f32.mrf.mxu0
  %810 = vmatprep.mubr.bf16.mxu0 0
  %811 = vmatmul.mubr.bf16.gmra.mxu0 %v357
  %v812 = vpop.f32.mrf.mxu0
  %v813 = vadd.f32 0.0, %v812
  %v814 = vpop.f32.mrf.mxu0
  %v815 = vpop.f32.mrf.mxu0
  %v816 = vadd.f32 0.0, %v815
  %v817 = vpop.f32.mrf.mxu0
  %818 = vmatprep.mubr.bf16.mxu0 0
  %819 = vmatmul.mubr.bf16.gmra.mxu0 %v358
  %v820 = vpop.f32.mrf.mxu0
  %v821 = vadd.f32 0.0, %v820
  %v822 = vpop.f32.mrf.mxu0
  %v823 = vpop.f32.mrf.mxu0
  %v824 = vadd.f32 0.0, %v823
  %v825 = vpop.f32.mrf.mxu0
  %826 = vmatprep.mubr.bf16.mxu0 0
  %827 = vmatmul.mubr.bf16.gmra.mxu0 %v359
  %v828 = vpop.f32.mrf.mxu0
  %v829 = vadd.f32 0.0, %v828
  %v830 = vpop.f32.mrf.mxu0
  %v831 = vpop.f32.mrf.mxu0
  %v832 = vadd.f32 0.0, %v831
  %v833 = vpop.f32.mrf.mxu0
  %834 = vmatprep.mubr.bf16.mxu0 0
  %835 = vmatmul.mubr.bf16.gmra.mxu0 %v360
  %v836 = vpop.f32.mrf.mxu0
  %v837 = vadd.f32 0.0, %v836
  %v838 = vpop.f32.mrf.mxu0
  %v839 = vpop.f32.mrf.mxu0
  %v840 = vadd.f32 0.0, %v839
  %v841 = vpop.f32.mrf.mxu0
  %842 = vdwg.mxu0
  %v843 = vadd.f32 %v660, %v781
  %v844 = vadd.f32 %v664, %v784
  %v845 = vadd.f32 %v670, %v789
  %v846 = vadd.f32 %v674, %v792
  %v847 = vadd.f32 %v680, %v797
  %v848 = vadd.f32 %v684, %v800
  %v849 = vadd.f32 %v690, %v805
  %v850 = vadd.f32 %v694, %v808
  %v851 = vadd.f32 %v700, %v813
  %v852 = vadd.f32 %v704, %v816
  %v853 = vadd.f32 %v710, %v821
  %v854 = vadd.f32 %v714, %v824
  %v855 = vadd.f32 %v720, %v829
  %v856 = vadd.f32 %v724, %v832
  %v857 = vadd.f32 %v730, %v837
  %v858 = vadd.f32 %v734, %v840
  %v859 = vld [vmem:[%s5] sm:$0x1]
  %v861 = vlaneseq
  %v862 = vshrl.u32 %v861, 7
  %v863 = vsub.s32 0, %v862
  %v864 = vrot.slane %v859, %v863
  %v866 = vadd.f32 %v843, %v864
  %v867 = vadd.f32 %v844, %v864
  %v868 = vadd.f32 %v845, %v864
  %v869 = vadd.f32 %v846, %v864
  %v870 = vadd.f32 %v847, %v864
  %v871 = vadd.f32 %v848, %v864
  %v872 = vadd.f32 %v849, %v864
  %v873 = vadd.f32 %v850, %v864
  %v874 = vadd.f32 %v851, %v864
  %v875 = vadd.f32 %v852, %v864
  %v876 = vadd.f32 %v853, %v864
  %v877 = vadd.f32 %v854, %v864
  %v878 = vadd.f32 %v855, %v864
  %v879 = vadd.f32 %v856, %v864
  %v880 = vadd.f32 %v857, %v864
  %v881 = vadd.f32 %v858, %v864
  %v882 = vlaneseq
  %v883 = vand.u32 %v882, 127
  %vm884 = vcmp.lt.s32.totalorder %v883, 5
  %v885 = vsel %vm884, %v866, -1e+30
  %v886 = vsel %vm884, %v867, -1e+30
  %v887 = vsel %vm884, %v868, -1e+30
  %v888 = vsel %vm884, %v869, -1e+30
  %v889 = vsel %vm884, %v870, -1e+30
  %v890 = vsel %vm884, %v871, -1e+30
  %v891 = vsel %vm884, %v872, -1e+30
  %v892 = vsel %vm884, %v873, -1e+30
  %v893 = vsel %vm884, %v874, -1e+30
  %v894 = vsel %vm884, %v875, -1e+30
  %v895 = vsel %vm884, %v876, -1e+30
  %v896 = vsel %vm884, %v877, -1e+30
  %v897 = vsel %vm884, %v878, -1e+30
  %v898 = vsel %vm884, %v879, -1e+30
  %v899 = vsel %vm884, %v880, -1e+30
  %v900 = vsel %vm884, %v881, -1e+30
  %901 = vmax.xlane.f32.xlu0 %v885
  %v902 = vpop.xlane.xlu0 %901
  %903 = vmax.xlane.f32.xlu0 %v886
  %v904 = vpop.xlane.xlu0 %903
  %905 = vmax.xlane.f32.xlu0 %v887
  %v906 = vpop.xlane.xlu0 %905
  %907 = vmax.xlane.f32.xlu0 %v888
  %v908 = vpop.xlane.xlu0 %907
  %909 = vmax.xlane.f32.xlu0 %v889
  %v910 = vpop.xlane.xlu0 %909
  %911 = vmax.xlane.f32.xlu0 %v890
  %v912 = vpop.xlane.xlu0 %911
  %913 = vmax.xlane.f32.xlu0 %v891
  %v914 = vpop.xlane.xlu0 %913
  %915 = vmax.xlane.f32.xlu0 %v892
  %v916 = vpop.xlane.xlu0 %915
  %917 = vmax.xlane.f32.xlu0 %v893
  %v918 = vpop.xlane.xlu0 %917
  %919 = vmax.xlane.f32.xlu0 %v894
  %v920 = vpop.xlane.xlu0 %919
  %921 = vmax.xlane.f32.xlu0 %v895
  %v922 = vpop.xlane.xlu0 %921
  %923 = vmax.xlane.f32.xlu0 %v896
  %v924 = vpop.xlane.xlu0 %923
  %925 = vmax.xlane.f32.xlu0 %v897
  %v926 = vpop.xlane.xlu0 %925
  %927 = vmax.xlane.f32.xlu0 %v898
  %v928 = vpop.xlane.xlu0 %927
  %929 = vmax.xlane.f32.xlu0 %v899
  %v930 = vpop.xlane.xlu0 %929
  %931 = vmax.xlane.f32.xlu0 %v900
  %v932 = vpop.xlane.xlu0 %931
  %v933 = vsub.f32 %v885, %v902
  %v934 = vsub.f32 %v886, %v904
  %v935 = vsub.f32 %v887, %v906
  %v936 = vsub.f32 %v888, %v908
  %v937 = vsub.f32 %v889, %v910
  %v938 = vsub.f32 %v890, %v912
  %v939 = vsub.f32 %v891, %v914
  %v940 = vsub.f32 %v892, %v916
  %v941 = vsub.f32 %v893, %v918
  %v942 = vsub.f32 %v894, %v920
  %v943 = vsub.f32 %v895, %v922
  %v944 = vsub.f32 %v896, %v924
  %v945 = vsub.f32 %v897, %v926
  %v946 = vsub.f32 %v898, %v928
  %v947 = vsub.f32 %v899, %v930
  %v948 = vsub.f32 %v900, %v932
  %v949 = vmul.f32 %v933, 1.442695
  %v950 = vpow.pop %v949
  %v951 = vmul.f32 %v934, 1.442695
  %v952 = vpow.pop %v951
  %v953 = vmul.f32 %v935, 1.442695
  %v954 = vpow.pop %v953
  %v955 = vmul.f32 %v936, 1.442695
  %v956 = vpow.pop %v955
  %v957 = vmul.f32 %v937, 1.442695
  %v958 = vpow.pop %v957
  %v959 = vmul.f32 %v938, 1.442695
  %v960 = vpow.pop %v959
  %v961 = vmul.f32 %v939, 1.442695
  %v962 = vpow.pop %v961
  %v963 = vmul.f32 %v940, 1.442695
  %v964 = vpow.pop %v963
  %v965 = vmul.f32 %v941, 1.442695
  %v966 = vpow.pop %v965
  %v967 = vmul.f32 %v942, 1.442695
  %v968 = vpow.pop %v967
  %v969 = vmul.f32 %v943, 1.442695
  %v970 = vpow.pop %v969
  %v971 = vmul.f32 %v944, 1.442695
  %v972 = vpow.pop %v971
  %v973 = vmul.f32 %v945, 1.442695
  %v974 = vpow.pop %v973
  %v975 = vmul.f32 %v946, 1.442695
  %v976 = vpow.pop %v975
  %v977 = vmul.f32 %v947, 1.442695
  %v978 = vpow.pop %v977
  %v979 = vmul.f32 %v948, 1.442695
  %v980 = vpow.pop %v979
  %981 = vadd.xlane.f32.xlu0 %v950
  %v982 = vpop.xlane.xlu0 %981
  %983 = vadd.xlane.f32.xlu0 %v952
  %v984 = vpop.xlane.xlu0 %983
  %985 = vadd.xlane.f32.xlu0 %v954
  %v986 = vpop.xlane.xlu0 %985
  %987 = vadd.xlane.f32.xlu0 %v956
  %v988 = vpop.xlane.xlu0 %987
  %989 = vadd.xlane.f32.xlu0 %v958
  %v990 = vpop.xlane.xlu0 %989
  %991 = vadd.xlane.f32.xlu0 %v960
  %v992 = vpop.xlane.xlu0 %991
  %993 = vadd.xlane.f32.xlu0 %v962
  %v994 = vpop.xlane.xlu0 %993
  %995 = vadd.xlane.f32.xlu0 %v964
  %v996 = vpop.xlane.xlu0 %995
  %997 = vadd.xlane.f32.xlu0 %v966
  %v998 = vpop.xlane.xlu0 %997
  %999 = vadd.xlane.f32.xlu0 %v968
  %v1000 = vpop.xlane.xlu0 %999
  %1001 = vadd.xlane.f32.xlu0 %v970
  %v1002 = vpop.xlane.xlu0 %1001
  %1003 = vadd.xlane.f32.xlu0 %v972
  %v1004 = vpop.xlane.xlu0 %1003
  %1005 = vadd.xlane.f32.xlu0 %v974
  %v1006 = vpop.xlane.xlu0 %1005
  %1007 = vadd.xlane.f32.xlu0 %v976
  %v1008 = vpop.xlane.xlu0 %1007
  %1009 = vadd.xlane.f32.xlu0 %v978
  %v1010 = vpop.xlane.xlu0 %1009
  %1011 = vadd.xlane.f32.xlu0 %v980
  %v1012 = vpop.xlane.xlu0 %1011
  %v1013 = vlog2.pop %v982
  %v1014 = vmul.f32 %v1013, 0.6931472
  %v1015 = vlog2.pop %v984
  %v1016 = vmul.f32 %v1015, 0.6931472
  %v1017 = vlog2.pop %v986
  %v1018 = vmul.f32 %v1017, 0.6931472
  %v1019 = vlog2.pop %v988
  %v1020 = vmul.f32 %v1019, 0.6931472
  %v1021 = vlog2.pop %v990
  %v1022 = vmul.f32 %v1021, 0.6931472
  %v1023 = vlog2.pop %v992
  %v1024 = vmul.f32 %v1023, 0.6931472
  %v1025 = vlog2.pop %v994
  %v1026 = vmul.f32 %v1025, 0.6931472
  %v1027 = vlog2.pop %v996
  %v1028 = vmul.f32 %v1027, 0.6931472
  %v1029 = vlog2.pop %v998
  %v1030 = vmul.f32 %v1029, 0.6931472
  %v1031 = vlog2.pop %v1000
  %v1032 = vmul.f32 %v1031, 0.6931472
  %v1033 = vlog2.pop %v1002
  %v1034 = vmul.f32 %v1033, 0.6931472
  %v1035 = vlog2.pop %v1004
  %v1036 = vmul.f32 %v1035, 0.6931472
  %v1037 = vlog2.pop %v1006
  %v1038 = vmul.f32 %v1037, 0.6931472
  %v1039 = vlog2.pop %v1008
  %v1040 = vmul.f32 %v1039, 0.6931472
  %v1041 = vlog2.pop %v1010
  %v1042 = vmul.f32 %v1041, 0.6931472
  %v1043 = vlog2.pop %v1012
  %v1044 = vmul.f32 %v1043, 0.6931472
  %v1045 = vsub.f32 %v933, %v1014
  %v1046 = vsub.f32 %v934, %v1016
  %v1047 = vsub.f32 %v935, %v1018
  %v1048 = vsub.f32 %v936, %v1020
  %v1049 = vsub.f32 %v937, %v1022
  %v1050 = vsub.f32 %v938, %v1024
  %v1051 = vsub.f32 %v939, %v1026
  %v1052 = vsub.f32 %v940, %v1028
  %v1053 = vsub.f32 %v941, %v1030
  %v1054 = vsub.f32 %v942, %v1032
  %v1055 = vsub.f32 %v943, %v1034
  %v1056 = vsub.f32 %v944, %v1036
  %v1057 = vsub.f32 %v945, %v1038
  %v1058 = vsub.f32 %v946, %v1040
  %v1059 = vsub.f32 %v947, %v1042
  %v1060 = vsub.f32 %v948, %v1044
  %v1061 = vsel %vm884, %v1045, 0.0
  %v1062 = vsel %vm884, %v1046, 0.0
  %v1063 = vsel %vm884, %v1047, 0.0
  %v1064 = vsel %vm884, %v1048, 0.0
  %v1065 = vsel %vm884, %v1049, 0.0
  %v1066 = vsel %vm884, %v1050, 0.0
  %v1067 = vsel %vm884, %v1051, 0.0
  %v1068 = vsel %vm884, %v1052, 0.0
  %v1069 = vsel %vm884, %v1053, 0.0
  %v1070 = vsel %vm884, %v1054, 0.0
  %v1071 = vsel %vm884, %v1055, 0.0
  %v1072 = vsel %vm884, %v1056, 0.0
  %v1073 = vsel %vm884, %v1057, 0.0
  %v1074 = vsel %vm884, %v1058, 0.0
  %v1075 = vsel %vm884, %v1059, 0.0
  %v1076 = vsel %vm884, %v1060, 0.0
  %1077 = vst [vmem:[%s6] sm:$0xff] %v1061
  %1078 = vst [vmem:[%s6 + $0x8] sm:$0xff] %v1062
  %1079 = vst [vmem:[%s6 + $0x10] sm:$0xff] %v1063
  %1080 = vst [vmem:[%s6 + $0x18] sm:$0xff] %v1064
  %1081 = vst [vmem:[%s6 + $0x20] sm:$0xff] %v1065
  %1082 = vst [vmem:[%s6 + $0x28] sm:$0xff] %v1066
  %1083 = vst [vmem:[%s6 + $0x30] sm:$0xff] %v1067
  %1084 = vst [vmem:[%s6 + $0x38] sm:$0xff] %v1068
  %1085 = vst [vmem:[%s6 + $0x40] sm:$0xff] %v1069
  %1086 = vst [vmem:[%s6 + $0x48] sm:$0xff] %v1070
  %1087 = vst [vmem:[%s6 + $0x50] sm:$0xff] %v1071
  %1088 = vst [vmem:[%s6 + $0x58] sm:$0xff] %v1072
  %1089 = vst [vmem:[%s6 + $0x60] sm:$0xff] %v1073
  %1090 = vst [vmem:[%s6 + $0x68] sm:$0xff] %v1074
  %1091 = vst [vmem:[%s6 + $0x70] sm:$0xff] %v1075
  %1092 = vst [vmem:[%s6 + $0x78] sm:$0xff] %v1076
  // Predicated region
  $region26: #{p1gcn_forward.1} parent=0 // pred_check
    _
  $region27: #{p1gcn_forward.1} parent=0 // pred_check_branch
    %1094 = sbr.rel (0) target = $region29
  $region28: #{p1gcn_forward.1} parent=0 // pred_region
    _
  $region29: #{p1gcn_forward.1} parent=0 // pred_fallthru
    _
  // Predicated region
  $region30: #{p1gcn_forward.1} parent=0 // pred_check
    _
  $region31: #{p1gcn_forward.1} parent=0 // pred_check_branch
    %1096 = sbr.rel (0) target = $region33
  $region32: #{p1gcn_forward.1} parent=0 // pred_region
    _
  $region33: #{p1gcn_forward.1} parent=0 // pred_fallthru
    _

</llo_original>
